<compile_context>
chip_gen: v5e
topology: v5e:2x2
jax: 0.10.0
libtpu: 0.0.40
codegen_flags: <defaults>
</compile_context>

<pallas_src>
import jax
import jax.numpy as jnp
from jax.experimental import pallas as pl
from jax.experimental.pallas import tpu as pltpu


def _pooler_matmul_kernel(p_ref, w_ref, b_ref, o_ref):
    # p_ref: (1, K, Bc)   w_ref: (Cout, K)   b_ref: (Cout, 1)   o_ref: (1, Cout, Bc)
    acc = jnp.dot(w_ref[...], p_ref[0],
                  preferred_element_type=jnp.float32)        # single MXU matmul
    o_ref[0] = (acc + b_ref[...]).astype(o_ref.dtype)


def simple_conv_pooler(x, weight, bias, *, max_block_cols=2048):
    """x: (N, Cin, D, H, W), weight: (Cout, Cin, KD, KH, KW), bias: (Cout,).

    Returns (N, Cout, Do*Ho*Wo) == PyTorch `self.conv(x).flatten(2)` (VALID conv).
    """
    N, Cin, D, H, W = x.shape
    Cout, _, KD, KH, KW = weight.shape
    Do, Ho, Wo = D - KD + 1, H - KH + 1, W - KW + 1
    K = Cin * KD * KH * KW
    cols = Do * Ho * Wo

    # --- wrapper glue: im2col, K axis ordered (cin, kd, kh, kw) to match the
    #     flattened weight; column axis ordered (d, h, w) to match flatten(2).
    taps = []
    for kd in range(KD):
        for kh in range(KH):
            for kw in range(KW):
                taps.append(x[:, :, kd:kd + Do, kh:kh + Ho, kw:kw + Wo])
    patches = jnp.stack(taps, axis=2).reshape(N, K, cols)    # (N, K, cols)
    w_flat = weight.reshape(Cout, K)                         # (Cout, K)
    b_col = bias.reshape(Cout, 1)                            # (Cout, 1)

    # Lane-dense column blocks: full extent when small, else a multiple of 128
    # (last partial block is handled by Pallas masking; each output column
    # depends only on its own patch column, so padding is safe).
    block_c = cols if cols <= max_block_cols else max_block_cols
    n_col_blocks = pl.cdiv(cols, block_c)

    out = pl.pallas_call(
        _pooler_matmul_kernel,
        out_shape=jax.ShapeDtypeStruct((N, Cout, cols), x.dtype),
        grid_spec=pltpu.PrefetchScalarGridSpec(
            num_scalar_prefetch=0,
            grid=(N, n_col_blocks),
            in_specs=[
                pl.BlockSpec((1, K, block_c), lambda b, c: (b, 0, c)),
                pl.BlockSpec((Cout, K), lambda b, c: (0, 0)),
                pl.BlockSpec((Cout, 1), lambda b, c: (0, 0)),
            ],
            out_specs=pl.BlockSpec((1, Cout, block_c), lambda b, c: (b, 0, c)),
        ),
        compiler_params=pltpu.CompilerParams(
            dimension_semantics=("parallel", "parallel")),
    )(patches, w_flat, b_col)
    return out


def _reference(x, weight, bias):
    out = jax.lax.conv_general_dilated(
        x, weight, window_strides=(1, 1, 1), padding="VALID",
        dimension_numbers=("NCDHW", "OIDHW", "NCDHW"))
    out = out + bias.reshape(1, -1, 1, 1, 1)
    N, Cout = out.shape[:2]
    return out.reshape(N, Cout, -1)


if __name__ == "__main__":
    # Module config: input_dim=4, output_dim=8, kernel_size=(1,7,7).
    N, Cin, D, H, W = 2, 4, 2, 14, 14
    Cout, KD, KH, KW = 8, 1, 7, 7

    key = jax.random.PRNGKey(0)
    kx, kw_, kb = jax.random.split(key, 3)
    x = jax.random.normal(kx, (N, Cin, D, H, W), jnp.float32)

    # Deterministic init (PyTorch Conv3d default: U(-b, b), b = 1/sqrt(fan_in))
    fan_in = Cin * KD * KH * KW
    bound = 1.0 / (fan_in ** 0.5)
    weight = jax.random.uniform(kw_, (Cout, Cin, KD, KH, KW), jnp.float32,
                                minval=-bound, maxval=bound)
    bias = jax.random.uniform(kb, (Cout,), jnp.float32,
                              minval=-bound, maxval=bound)

    pooler = jax.jit(simple_conv_pooler)
    out = jax.block_until_ready(pooler(x, weight, bias))

    ref = _reference(x, weight, bias)
    expected_shape = (N, Cout, (D - KD + 1) * (H - KH + 1) * (W - KW + 1))
    assert out.shape == ref.shape == expected_shape
    assert jnp.allclose(out, ref, rtol=1e-4, atol=1e-4)
    print("KERNEL_OK")
</pallas_src>

<mosaic_0001>
module attributes {stable_mosaic.version = 11 : i64} {
  func.func @_pooler_matmul_kernel(%arg0: i32, %arg1: i32, %arg2: memref<1x196x128xf32, #tpu.memory_space<vmem>>, %arg3: memref<8x196xf32, #tpu.memory_space<vmem>>, %arg4: memref<8x1xf32, #tpu.memory_space<vmem>>, %arg5: memref<1x8x128xf32, #tpu.memory_space<vmem>>) attributes {dimension_semantics = [#tpu.dimension_semantics<parallel>, #tpu.dimension_semantics<parallel>], iteration_bounds = array<i64: 2, 1>, scalar_prefetch = 0 : i64, scratch_operands = 0 : i64, tpu.core_type = #tpu.core_type<tc>, window_params = [{transform_indices = @transform_0, window_bounds = array<i64: 1, 196, 128>}, {pipeline_mode = #tpu.pipeline_mode<synchronous>, transform_indices = @transform_1, window_bounds = array<i64: 8, 196>}, {pipeline_mode = #tpu.pipeline_mode<synchronous>, transform_indices = @transform_2, window_bounds = array<i64: 8, 1>}, {transform_indices = @transform_3, window_bounds = array<i64: 1, 8, 128>}]} {
    %c0 = arith.constant 0 : index
    %c0_0 = arith.constant 0 : index
    %0 = vector.load %arg3[%c0, %c0_0] : memref<8x196xf32, #tpu.memory_space<vmem>>, vector<8x196xf32>
    %c0_1 = arith.constant 0 : index
    %c0_2 = arith.constant 0 : index
    %c0_3 = arith.constant 0 : index
    %1 = vector.load %arg2[%c0_1, %c0_2, %c0_3] : memref<1x196x128xf32, #tpu.memory_space<vmem>>, vector<1x196x128xf32>
    %2 = vector.shape_cast %1 : vector<1x196x128xf32> to vector<196x128xf32>
    %cst = arith.constant dense<0.000000e+00> : vector<8x128xf32>
    %3 = tpu.matmul %0, %2, %cst {dimension_numbers = #tpu.dot_dimension_numbers<[1], [0], [0], [1], [0, 0, 1, 1], [], []>} : vector<8x196xf32>, vector<196x128xf32>, vector<8x128xf32> -> vector<8x128xf32>
    %c0_4 = arith.constant 0 : index
    %c0_5 = arith.constant 0 : index
    %4 = vector.load %arg4[%c0_4, %c0_5] : memref<8x1xf32, #tpu.memory_space<vmem>>, vector<8x1xf32>
    %5 = vector.broadcast %4 : vector<8x1xf32> to vector<8x128xf32>
    %6 = arith.addf %3, %5 : vector<8x128xf32>
    %c0_6 = arith.constant 0 : index
    %c0_7 = arith.constant 0 : index
    %c0_8 = arith.constant 0 : index
    %7 = vector.load %arg5[%c0_6, %c0_7, %c0_8] : memref<1x8x128xf32, #tpu.memory_space<vmem>>, vector<1x8x128xf32>
    %8 = vector.shape_cast %7 : vector<1x8x128xf32> to vector<8x128xf32>
    %9 = vector.shape_cast %6 : vector<8x128xf32> to vector<1x8x128xf32>
    tpu.vector_store %arg5[%c0_6, %c0_7, %c0_8], %9 {strides = array<i32>} : memref<1x8x128xf32, #tpu.memory_space<vmem>>, vector<1x8x128xf32>,
    return
  }
  func.func @transform_0(%arg0: i32, %arg1: i32) -> (i32, i32, i32) {
    %c0_i32 = arith.constant 0 : i32
    %c0_i32_0 = arith.constant 0 : i32
    return %arg0, %c0_i32, %arg1 : i32, i32, i32
  }
  func.func @transform_1(%arg0: i32, %arg1: i32) -> (i32, i32) {
    %c0_i32 = arith.constant 0 : i32
    %c0_i32_0 = arith.constant 0 : i32
    %c0_i32_1 = arith.constant 0 : i32
    return %c0_i32, %c0_i32_0 : i32, i32
  }
  func.func @transform_2(%arg0: i32, %arg1: i32) -> (i32, i32) {
    %c0_i32 = arith.constant 0 : i32
    %c0_i32_0 = arith.constant 0 : i32
    %c0_i32_1 = arith.constant 0 : i32
    return %c0_i32, %c0_i32_0 : i32, i32
  }
  func.func @transform_3(%arg0: i32, %arg1: i32) -> (i32, i32, i32) {
    %c0_i32 = arith.constant 0 : i32
    %c0_i32_0 = arith.constant 0 : i32
    return %arg0, %c0_i32, %arg1 : i32, i32, i32
  }
}

</mosaic_0001>

<llo_original>
// kernel: simple_conv_pooler.1
$region0: #{simple_conv_pooler.1}
  #allocation0 [shape = 'u32[]', space=smem, size = 0x4, offset = 0x4, fixed_abs, tag = 'smem constant byte address 0x4 - core index']
  #allocation1 [shape = 'u32[72,128]{1,0:T(1,128)}', space=vmem, size = 0x9000, scoped, tag = 'internal scratch']
  %s0 = inlined_call_operand.vmem [shape: f32[2,196,128], index: 0, kind: input, shape index: {}]
  %s1 = inlined_call_operand.vmem [shape: f32[8,196], index: 1, kind: input, shape index: {}]
  %s2 = inlined_call_operand.vmem [shape: f32[8,1], index: 2, kind: input, shape index: {}]
  %s3 = inlined_call_operand.hbm [shape: f32[2,8,128], index: 3, kind: output, shape index: {}]
  %s4 = sld [smem:[#allocation0]]
  $region45: #{simple_conv_pooler.1} parent=0
    _
  %s6 = ssub.s32 1, %s4
  %s7 = scalar_select 0, %s6, %s4
  $region1: #{simple_conv_pooler.1} parent=0
    #allocation2 [shape = 'u8[8192]{0}', space=vmem, size = 0x2000, scoped, tag = 'output window, operand 0']
    #allocation3 [shape = 's32[2]{0}', space=sflag, size = 0x8, scoped, tag = 'scoped memory for simple_conv_pooler.1']
    %8 = vsyncpa [#allocation3], 0
    %s9 = scalar_lea.sflag [#allocation3], 1
    %10 = vsyncpa %s9, 0
    loop: start=0, step=1, limit=4
    $region2: #{simple_conv_pooler.1} parent=1 // loop_pre_header
      _
    $region3: #{simple_conv_pooler.1} parent=1 // loop_header
      %s12 = sphi 0, %s16
      %p13 = scmp.ge.s32.totalorder %s12, 4
      %s19 = sphi 0, %s31
      %s20 = sphi 0, %s27
      %s21 = sphi 0, %s19
      %s22 = sphi 0, %s20
      %s23 = sphi 0, %s21
      %s24 = sphi 0, %s22
      %s36 = sphi 0, %s38
      %s39 = sphi 0, %s36
      %s40 = sphi 0, %s39
      %s56 = sphi 0, %s40
      %s60 = sphi 0, %s60
      %s62 = sphi 0, %s60
      %s63 = sphi 0, %s62
      %s77 = sphi 0, %s63
      %s81 = sphi 0, %s81
      %s83 = sphi 0, %s81
      %s84 = sphi 0, %s83
      %s98 = sphi 0, %s84
      %s106 = sphi 0, %s108
      %s109 = sphi 0, %s106
      %s110 = sphi 0, %s109
      %s126 = sphi 0, %s110
    $region4: #{simple_conv_pooler.1} parent=1 // loop_header_branch
      %15 = sbr.rel (%p13) target = $region8
    $region5: #{simple_conv_pooler.1} parent=1 // loop_body
      %s17 = ssub.s32 %s12, 1
      %s18 = ssub.s32 %s12, 2
      %s25 = sadd.s32 1, %s20
      %p26 = scmp.ge.s32.totalorder %s25, 1
      %s27 = scalar_select %p26, 0, %s25
      %s28 = sadd.s32 1, %s19
      %s29 = scalar_select %p26, %s28, %s19
      %p30 = scmp.ge.s32.totalorder %s29, 2
      %s31 = scalar_select %p30, 0, %s29
      %s32 = ssub.s32 %s19, %s31
      %s33 = ssub.s32 %s20, %s27
      %s34 = sor.u32 %s32, %s33
      %p35 = scmp.eq.s32.totalorder %s34, 0
      %s37 = sadd.s32 %s36, 1
      %s38 = scalar_select %p35, %s36, %s37
      %p41 = pneg %p35
      %p42 = scmp.eq.s32.totalorder %s12, 1
      %p43 = por %p41, %p42
      %p44 = scmp.ne.s32.totalorder %s36, %s39
      %p45 = scmp.eq.s32.totalorder %s12, 0
      %p46 = por %p44, %p45
      %p47 = scmp.ne.s32.totalorder %s36, %s39
      %p48 = scmp.eq.s32.totalorder %s17, 1
      %p49 = por %p47, %p48
      %p50 = scmp.ne.s32.totalorder %s39, %s40
      %p51 = scmp.eq.s32.totalorder %s17, 0
      %p52 = por %p50, %p51
      %p53 = scmp.ne.s32.totalorder %s39, %s40
      %p54 = scmp.eq.s32.totalorder %s18, 1
      %p55 = por %p53, %p54
      %p57 = scmp.ne.s32.totalorder %s40, %s56
      %p58 = scmp.eq.s32.totalorder %s18, 0
      %p59 = por %p57, %p58
      %s61 = sadd.s32 %s60, 1
      %p64 = scmp.eq.s32.totalorder %s12, 1
      %p65 = scmp.ne.s32.totalorder %s60, %s62
      %p66 = scmp.eq.s32.totalorder %s12, 0
      %p67 = por %p65, %p66
      %p68 = scmp.ne.s32.totalorder %s60, %s62
      %p69 = scmp.eq.s32.totalorder %s17, 1
      %p70 = por %p68, %p69
      %p71 = scmp.ne.s32.totalorder %s62, %s63
      %p72 = scmp.eq.s32.totalorder %s17, 0
      %p73 = por %p71, %p72
      %p74 = scmp.ne.s32.totalorder %s62, %s63
      %p75 = scmp.eq.s32.totalorder %s18, 1
      %p76 = por %p74, %p75
      %p78 = scmp.ne.s32.totalorder %s63, %s77
      %p79 = scmp.eq.s32.totalorder %s18, 0
      %p80 = por %p78, %p79
      %s82 = sadd.s32 %s81, 1
      %p85 = scmp.eq.s32.totalorder %s12, 1
      %p86 = scmp.ne.s32.totalorder %s81, %s83
      %p87 = scmp.eq.s32.totalorder %s12, 0
      %p88 = por %p86, %p87
      %p89 = scmp.ne.s32.totalorder %s81, %s83
      %p90 = scmp.eq.s32.totalorder %s17, 1
      %p91 = por %p89, %p90
      %p92 = scmp.ne.s32.totalorder %s83, %s84
      %p93 = scmp.eq.s32.totalorder %s17, 0
      %p94 = por %p92, %p93
      %p95 = scmp.ne.s32.totalorder %s83, %s84
      %p96 = scmp.eq.s32.totalorder %s18, 1
      %p97 = por %p95, %p96
      %p99 = scmp.ne.s32.totalorder %s84, %s98
      %p100 = scmp.eq.s32.totalorder %s18, 0
      %p101 = por %p99, %p100
      %s102 = ssub.s32 %s19, %s31
      %s103 = ssub.s32 %s20, %s27
      %s104 = sor.u32 %s102, %s103
      %p105 = scmp.eq.s32.totalorder %s104, 0
      %s107 = sadd.s32 %s106, 1
      %s108 = scalar_select %p105, %s106, %s107
      %p111 = pneg %p105
      %p112 = scmp.eq.s32.totalorder %s12, 1
      %p113 = por %p111, %p112
      %p114 = scmp.ne.s32.totalorder %s106, %s109
      %p115 = scmp.eq.s32.totalorder %s12, 0
      %p116 = por %p114, %p115
      %p117 = scmp.ne.s32.totalorder %s106, %s109
      %p118 = scmp.eq.s32.totalorder %s17, 1
      %p119 = por %p117, %p118
      %p120 = scmp.ne.s32.totalorder %s109, %s110
      %p121 = scmp.eq.s32.totalorder %s17, 0
      %p122 = por %p120, %p121
      %p123 = scmp.ne.s32.totalorder %s109, %s110
      %p124 = scmp.eq.s32.totalorder %s18, 1
      %p125 = por %p123, %p124
      %p127 = scmp.ne.s32.totalorder %s110, %s126
      %p128 = scmp.eq.s32.totalorder %s18, 0
      %p129 = por %p127, %p128
      %p130 = scmp.le.s32.totalorder 1, %s12
      %p131 = scmp.lt.s32.totalorder %s12, 3
      %p132 = pnand %p130, %p131
      %p133 = pneg %p132
      // Predicated region
      $region9: #{simple_conv_pooler.1} parent=5 // pred_check
        _
      $region10: #{simple_conv_pooler.1} parent=5 // pred_check_branch
        %135 = sbr.rel (%p132) target = $region12
      $region11: #{simple_conv_pooler.1} parent=5 // pred_region
        %s136 = ssub.s32 %s12, 1
        // Predicated region
        $region13: #{simple_conv_pooler.1} parent=11 // pred_check
          %p137 = pneg %p73
        $region14: #{simple_conv_pooler.1} parent=11 // pred_check_branch
          %139 = sbr.rel (%p137) target = $region16
        $region15: #{simple_conv_pooler.1} parent=11 // pred_region
          _
        $region16: #{simple_conv_pooler.1} parent=11 // pred_fallthru
          _
        // Predicated region
        $region17: #{simple_conv_pooler.1} parent=11 // pred_check
          %p140 = pneg %p94
        $region18: #{simple_conv_pooler.1} parent=11 // pred_check_branch
          %142 = sbr.rel (%p140) target = $region20
        $region19: #{simple_conv_pooler.1} parent=11 // pred_region
          _
        $region20: #{simple_conv_pooler.1} parent=11 // pred_fallthru
          _
      $region12: #{simple_conv_pooler.1} parent=5 // pred_fallthru
        _
      %p143 = scmp.lt.s32.totalorder %s12, 2
      // Predicated region
      $region21: #{simple_conv_pooler.1} parent=5 // pred_check
        %p144 = pneg %p143
      $region22: #{simple_conv_pooler.1} parent=5 // pred_check_branch
        %146 = sbr.rel (%p144) target = $region24
      $region23: #{simple_conv_pooler.1} parent=5 // pred_region
        // Predicated region
        $region25: #{simple_conv_pooler.1} parent=23 // pred_check
          %p147 = pneg %p46
        $region26: #{simple_conv_pooler.1} parent=23 // pred_check_branch
          %149 = sbr.rel (%p147) target = $region28
        $region27: #{simple_conv_pooler.1} parent=23 // pred_region
          %p150 = scmp.lt.s32.totalorder %s19, 1
          %s151 = scalar_select %p150, %s19, 1
          %p152 = scmp.lt.s32.totalorder %s20, 0
          %s153 = scalar_select %p152, %s20, 0
          %s154 = smul.addr %s151, 25
          %s155 = sadd.s32 %s153, %s154
          %s156 = smul.addr %s155, 8
          %s157 = scalar_lea.vmem %s0, %s156
        $region28: #{simple_conv_pooler.1} parent=23 // pred_fallthru
          _
      $region24: #{simple_conv_pooler.1} parent=5 // pred_fallthru
        _
      %p158 = scmp.le.s32.totalorder 1, %s12
      %p159 = scmp.lt.s32.totalorder %s12, 3
      %p160 = pnand %p158, %p159
      %p161 = pneg %p160
      // Predicated region
      $region29: #{simple_conv_pooler.1} parent=5 // pred_check
        _
      $region30: #{simple_conv_pooler.1} parent=5 // pred_check_branch
        %163 = sbr.rel (%p160) target = $region32
      $region31: #{simple_conv_pooler.1} parent=5 // pred_region
        %s164 = ssub.s32 %s12, 1
        %p165 = scmp.lt.s32.totalorder %s21, 1
        %s166 = scalar_select %p165, %s21, 1
        %p167 = scmp.lt.s32.totalorder %s22, 0
        %s168 = scalar_select %p167, %s22, 0
        %s169 = smul.addr %s166, 25
        %s170 = sadd.s32 %s168, %s169
        %s171 = smul.addr %s170, 8
        %s172 = scalar_lea.vmem %s0, %s171
        %p173 = pneg %p52
        %p174 = pneg %p49
        %p175 = pneg %p73
        %p176 = pneg %p70
        %p177 = pneg %p94
        %p178 = pneg %p91
        %p179 = pneg %p122
        %p180 = pneg %p119
        %s181 = sand.u32 %s109, 1
        %s182 = scalar_lea.sflag [#allocation3], %s181
        %s183 = sand.u32 %s109, 1
        %s184 = smul.addr %s183, 8
        %s185 = scalar_lea.vmem [#allocation2], %s184
        %p186 = scmp.lt.s32.totalorder %s21, 1
        %s187 = scalar_select %p186, %s21, 1
        %p188 = scmp.lt.s32.totalorder %s22, 0
        %s189 = scalar_select %p188, %s22, 0
        %s190 = smul.addr %s187, 25
        %s191 = sadd.s32 %s189, %s190
        %s192 = smul.addr %s191, 8
        %s193 = scalar_lea.vmem %s0, %s192
        %v194 = vld [vmem:[%s1] sm:$0xff]
        %v195 = vld [vmem:[%s1 + $0x8] sm:$0xff]
        %v196 = vld [vmem:[%s193] sm:$0xff]
        %v197 = vld [vmem:[%s193 + $0x8] sm:$0xff]
        %v198 = vld [vmem:[%s193 + $0x10] sm:$0xff]
        %v199 = vld [vmem:[%s193 + $0x18] sm:$0xff]
        %v200 = vld [vmem:[%s193 + $0x20] sm:$0xff]
        %v201 = vld [vmem:[%s193 + $0x28] sm:$0xff]
        %v202 = vld [vmem:[%s193 + $0x30] sm:$0xff]
        %v203 = vld [vmem:[%s193 + $0x38] sm:$0xff]
        %v204 = vld [vmem:[%s193 + $0x40] sm:$0xff]
        %v205 = vld [vmem:[%s193 + $0x48] sm:$0xff]
        %v206 = vld [vmem:[%s193 + $0x50] sm:$0xff]
        %v207 = vld [vmem:[%s193 + $0x58] sm:$0xff]
        %v208 = vld [vmem:[%s193 + $0x60] sm:$0xff]
        %v209 = vld [vmem:[%s193 + $0x68] sm:$0xff]
        %v210 = vld [vmem:[%s193 + $0x70] sm:$0xff]
        %v211 = vld [vmem:[%s193 + $0x78] sm:$0xff]
        %v212 = vld [vmem:[%s193 + $0x80] sm:$0xff]
        %v213 = vld [vmem:[%s193 + $0x88] sm:$0xff]
        %v214 = vld [vmem:[%s193 + $0x90] sm:$0xff]
        %v215 = vld [vmem:[%s193 + $0x98] sm:$0xff]
        %v216 = vld [vmem:[%s193 + $0xa0] sm:$0xff]
        %v217 = vld [vmem:[%s193 + $0xa8] sm:$0xff]
        %v218 = vld [vmem:[%s193 + $0xb0] sm:$0xff]
        %v219 = vld [vmem:[%s193 + $0xb8] sm:$0xff]
        %v220 = vld [vmem:[%s193 + $0xc0] sm:$0xf]
        %v221 = vld [vmem:[%s2] sm:$0xff]
        %223 = vset.pattern.permute.xlu0 0
        %224 = vperm.xlu0 %223, %v221
        %v225 = vpop.permute.xlu0 %224
        %vm227 = vcmask 556032
        %v229 = vsel %vm227, %v195, 0
        %vm231 = vcmask 1043456
        %v233 = vsel %vm231, %v220, 0
        %235 = vmatpush.msra.mxu0 %v211
        %236 = vmatpush.msra.mxu0 %v210
        %237 = vmatpush.msra.mxu0 %v209
        %238 = vmatpush.msra.mxu0 %v208
        %239 = vmatpush.msra.mxu0 %v207
        %240 = vmatpush.msra.mxu0 %v206
        %241 = vmatpush.msra.mxu0 %v205
        %242 = vmatpush.msra.mxu0 %v204
        %243 = vmatpush.msra.mxu0 %v203
        %244 = vmatpush.msra.mxu0 %v202
        %245 = vmatpush.msra.mxu0 %v201
        %246 = vmatpush.msra.mxu0 %v200
        %247 = vmatpush.msra.mxu0 %v199
        %248 = vmatpush.msra.mxu0 %v198
        %249 = vmatpush.msra.mxu0 %v197
        %250 = vmatpush.msra.mxu0 %v196
        %251 = vmatmul.f32.gmra.mxu0 %v194
        %v252 = vpop.f32.mrf.mxu0
        %v253 = vadd.f32 %v225, %v252
        %254 = vdwg.mxu0
        %255 = vmatpush.msra.mxu0 0.0
        %256 = vmatpush.msra.mxu0 0.0
        %257 = vmatpush.msra.mxu0 0.0
        %258 = vmatpush.msra.mxu0 0.0
        %259 = vmatpush.msra.mxu0 0.0
        %260 = vmatpush.msra.mxu0 0.0
        %261 = vmatpush.msra.mxu0 0.0
        %262 = vmatpush.msra.mxu0 %v233
        %263 = vmatpush.msra.mxu0 %v219
        %264 = vmatpush.msra.mxu0 %v218
        %265 = vmatpush.msra.mxu0 %v217
        %266 = vmatpush.msra.mxu0 %v216
        %267 = vmatpush.msra.mxu0 %v215
        %268 = vmatpush.msra.mxu0 %v214
        %269 = vmatpush.msra.mxu0 %v213
        %270 = vmatpush.msra.mxu0 %v212
        %271 = vmatmul.f32.gmra.mxu0 %v229
        %v272 = vpop.f32.mrf.mxu0
        %v273 = vadd.f32 %v253, %v272
        %274 = vdwg.mxu0
        %275 = vst [vmem:[%s185] sm:$0xff] %v273
        %s276 = sand.u32 %s109, 1
        %s277 = scalar_lea.sflag [#allocation3], %s276
        %s278 = sand.u32 %s109, 1
        %s279 = smul.addr %s278, 8
        %s280 = scalar_lea.vmem [#allocation2], %s279
        // Predicated region
        $region33: #{simple_conv_pooler.1} parent=31 // pred_check
          %p281 = pneg %p119
        $region34: #{simple_conv_pooler.1} parent=31 // pred_check_branch
          %283 = sbr.rel (%p281) target = $region36
        $region35: #{simple_conv_pooler.1} parent=31 // pred_region
          %285 = vsyncadd %s277, 0
          %s286 = sadd.s32 %s22, %s21
          %s287 = smul.addr %s286, 8
          %s288 = scalar_lea.hbm %s3, %s287
          %s290 = sshll.u32 %s280, 4
          %s291 = int_to_ptr.vmem [resolvable:$true] %s290
          %s292 = sshll.u32 %s288, 4
          %s293 = int_to_ptr.hbm [resolvable:$true] %s292
          %295 = dma.vmem_to_hbm [thread:$0]  %s291, 128, %s293, %s277
        $region36: #{simple_conv_pooler.1} parent=31 // pred_fallthru
          _
      $region32: #{simple_conv_pooler.1} parent=5 // pred_fallthru
        _
      %p296 = scmp.le.s32.totalorder 2, %s12
      // Predicated region
      $region37: #{simple_conv_pooler.1} parent=5 // pred_check
        %p297 = pneg %p296
      $region38: #{simple_conv_pooler.1} parent=5 // pred_check_branch
        %299 = sbr.rel (%p297) target = $region40
      $region39: #{simple_conv_pooler.1} parent=5 // pred_region
        %s300 = ssub.s32 %s12, 2
        // Predicated region
        $region41: #{simple_conv_pooler.1} parent=39 // pred_check
          %p301 = pneg %p125
        $region42: #{simple_conv_pooler.1} parent=39 // pred_check_branch
          %303 = sbr.rel (%p301) target = $region44
        $region43: #{simple_conv_pooler.1} parent=39 // pred_region
          %s304 = sand.u32 %s110, 1
          %s305 = scalar_lea.sflag [#allocation3], %s304
          %s306 = sand.u32 %s110, 1
          %s307 = smul.addr %s306, 8
          %s308 = scalar_lea.vmem [#allocation2], %s307
          %310 = dma.done %s305, 128
        $region44: #{simple_conv_pooler.1} parent=39 // pred_fallthru
          _
      $region40: #{simple_conv_pooler.1} parent=5 // pred_fallthru
        _
    $region6: #{simple_conv_pooler.1} parent=1 // loop_footer
      %s16 = sadd.s32 1, %s12
    $region7: #{simple_conv_pooler.1} parent=1 // loop_footer_branch
      %11 = sbr.rel target = $region3
    $region8: #{simple_conv_pooler.1} parent=1 // loop_exit
      _
    %311 = vsyncpa [#allocation3], 1
    %s312 = scalar_lea.sflag [#allocation3], 1
    %313 = vsyncpa %s312, 1

</llo_original>
